<compile_context>
chip_gen: v6e
topology: v6e:2x2x1
jax: 0.10.0
libtpu: 0.0.40
codegen_flags: <defaults>
</compile_context>

<pallas_src>
import functools

import jax
import jax.numpy as jnp
import numpy as np
from jax import lax
from jax.experimental import pallas as pl
from jax.experimental.pallas import tpu as pltpu

# ----------------------------- config (small, synthetic) -----------------------------
B = 2              # batch
ND = 4             # num_dataset (size of dataset one-hot `d`)
NUM_CLASSES = 1    # cfg.model.ssl_spec.num_classes (UTMOSv2 predicts a single MOS score)
T = 8              # SSL frames
D1 = 32            # SSL frame feature dim
H_SSL = 32         # SSL pooled feature dim  -> ssl.fc.in_features  = H_SSL + ND
C_IN = 4           # spectrogram channels
HH = WW = 16       # spectrogram spatial size
KH = KW = 3        # conv kernel
F_SPEC = 16        # spec pooled feature dim -> spec_long.fc.in_features = F_SPEC + ND
HO, WO = HH - KH + 1, WW - KW + 1   # VALID conv output spatial size
S_SPEC = HO * WO                    # spatial positions per image
K_COL = KH * KW * C_IN              # im2col contraction size
FC_IN = (H_SSL + ND) + (F_SPEC + ND) + ND   # final fc in_features

assert NUM_CLASSES == 1  # head below is computed as a VPU lane-reduce (see _fused_kernel)


# ----------------------------------- Pallas kernel ------------------------------------
def _fused_kernel(x1_ref, w_ssl_ref, b_ssl_ref,
                  xcol_ref, w_conv_ref, b_conv_ref,
                  d_ref, w1t_ref, w2t_ref, w3t_ref, b_fc_ref,
                  o_ref):
    """Entire forward in one gridless, VMEM-resident invocation."""
    w_ssl = w_ssl_ref[...]          # (D1, H_SSL)
    b_ssl = b_ssl_ref[...]          # (1, H_SSL)
    w_conv = w_conv_ref[...]        # (K_COL, F_SPEC)
    b_conv = b_conv_ref[...]        # (1, F_SPEC)

    ssl_rows = []
    spec_rows = []
    for b in range(B):              # B is a small static constant -> unrolled
        # ---- SSL branch (SSLExtModel, fc=Identity): tanh(frames @ W + b), mean over frames ----
        h_ssl = jnp.tanh(
            jnp.dot(x1_ref[b], w_ssl, preferred_element_type=jnp.float32) + b_ssl)
        ssl_rows.append(jnp.mean(h_ssl, axis=0, keepdims=True))        # (1, H_SSL)

        # ---- spec branch (MultiSpecExtModel, fc=Identity): conv-as-im2col + ReLU + GAP ----
        h_spec = jnp.maximum(
            jnp.dot(xcol_ref[b], w_conv, preferred_element_type=jnp.float32) + b_conv,
            0.0)
        spec_rows.append(jnp.mean(h_spec, axis=0, keepdims=True))      # (1, F_SPEC)

    ssl_feat = jnp.concatenate(ssl_rows, axis=0)     # (B, H_SSL)
    spec_feat = jnp.concatenate(spec_rows, axis=0)   # (B, F_SPEC)

    # ---- head: fc(cat([ssl_feat, 0, spec_feat, 0, d])) with the zero rows of w_fc removed.
    #      NUM_CLASSES == 1, so run it on the VPU (broadcast mul + lane reduce) instead of an
    #      N=1 MXU matmul that would produce lane-sparse masked stores.
    out = (jnp.sum(ssl_feat * w1t_ref[...], axis=-1, keepdims=True)
           + jnp.sum(spec_feat * w2t_ref[...], axis=-1, keepdims=True)
           + jnp.sum(d_ref[...] * w3t_ref[...], axis=-1, keepdims=True)
           + b_fc_ref[...])                                             # (B, 1)
    o_ref[...] = out


def _fused_call(*args):
    vmem = lambda: pl.BlockSpec(memory_space=pltpu.MemorySpace.VMEM)
    return pl.pallas_call(
        _fused_kernel,
        out_shape=jax.ShapeDtypeStruct((B, NUM_CLASSES), jnp.float32),
        in_specs=[vmem() for _ in args],
        out_specs=vmem(),
    )(*args)


# --------------------------------- forward (wrapper) ---------------------------------
def ssl_multispec_forward(params, x1, x2_nchw, d):
    b = x1.shape[0]

    # spec-branch activation prep: NCHW -> NHWC + im2col (cheap glue; kernel consumes xcol
    # directly so no intermediate features ever hit HBM).
    # TODO(synk): im2col could also be built in-kernel from a single VMEM copy of x2.
    x2 = jnp.transpose(x2_nchw, (0, 2, 3, 1))
    patches = [x2[:, kh:kh + HO, kw:kw + WO, :] for kh in range(KH) for kw in range(KW)]
    xcol = jnp.concatenate(patches, axis=-1).reshape(b, S_SPEC, K_COL)
    w_conv_col = params["w_conv"].reshape(K_COL, F_SPEC)

    # Final-fc weight slices: the rows that multiply the zeros_d paddings contribute nothing,
    # so only the live slices are passed (bit-identical to cat([x1, x2, d]) @ w_fc).
    w_fc = params["w_fc"]
    w1t = w_fc[:H_SSL, :].T                                  # (1, H_SSL)
    w2t = w_fc[H_SSL + ND:H_SSL + ND + F_SPEC, :].T          # (1, F_SPEC)
    w3t = w_fc[H_SSL + ND + F_SPEC + ND:, :].T               # (1, ND)

    return _fused_call(x1, params["w_ssl"], params["b_ssl"],
                       xcol, w_conv_col, params["b_conv"],
                       d, w1t, w2t, w3t, params["b_fc"])


# --------------------------------- pure-JAX reference --------------------------------
def reference(params, x1, x2_nchw, d):
    hp = lax.Precision.HIGHEST
    h = jnp.tanh(jnp.einsum("btd,dh->bth", x1, params["w_ssl"], precision=hp)
                 + params["b_ssl"][None])
    ssl_feat = h.mean(axis=1)

    x2 = jnp.transpose(x2_nchw, (0, 2, 3, 1))
    conv = lax.conv_general_dilated(
        x2, params["w_conv"], (1, 1), "VALID",
        dimension_numbers=("NHWC", "HWIO", "NHWC"), precision=hp)
    conv = jnp.maximum(conv + params["b_conv"][None], 0.0)
    spec_feat = conv.mean(axis=(1, 2))

    zeros_d = jnp.zeros((x1.shape[0], ND), jnp.float32)
    x = jnp.concatenate([ssl_feat, zeros_d, spec_feat, zeros_d, d], axis=1)
    return jnp.dot(x, params["w_fc"], precision=hp) + params["b_fc"]


# ---------------------------------------- main ---------------------------------------
def make_params(key):
    k = jax.random.split(key, 6)
    return {
        "w_ssl": 0.1 * jax.random.normal(k[0], (D1, H_SSL), jnp.float32),
        "b_ssl": 0.1 * jax.random.normal(k[1], (1, H_SSL), jnp.float32),
        "w_conv": 0.1 * jax.random.normal(k[2], (KH, KW, C_IN, F_SPEC), jnp.float32),
        "b_conv": 0.1 * jax.random.normal(k[3], (1, F_SPEC), jnp.float32),
        "w_fc": 0.1 * jax.random.normal(k[4], (FC_IN, NUM_CLASSES), jnp.float32),
        "b_fc": 0.1 * jax.random.normal(k[5], (1, NUM_CLASSES), jnp.float32),
    }


if __name__ == "__main__":
    root = jax.random.PRNGKey(0)
    kx1, kx2, kp = jax.random.split(root, 3)

    x1 = jax.random.normal(kx1, (B, T, D1), jnp.float32)          # SSL-frame features
    x2 = jax.random.normal(kx2, (B, C_IN, HH, WW), jnp.float32)   # NCHW spectrograms
    d = jax.nn.one_hot(jnp.arange(B) % ND, ND, dtype=jnp.float32)  # dataset one-hot

    params = make_params(kp)

    out = jax.jit(functools.partial(ssl_multispec_forward, params))(x1, x2, d)
    out = jax.block_until_ready(out)

    ref = reference(params, x1, x2, d)
    assert out.shape == (B, NUM_CLASSES), out.shape
    np.testing.assert_allclose(np.asarray(out), np.asarray(ref), rtol=2e-3, atol=2e-3)

    print("KERNEL_OK")
</pallas_src>

<mosaic_0001>
module attributes {stable_mosaic.version = 11 : i64} {
  func.func @_fused_kernel(%arg0: memref<2x8x32xf32, #tpu.memory_space<vmem>>, %arg1: memref<32x32xf32, #tpu.memory_space<vmem>>, %arg2: memref<1x32xf32, #tpu.memory_space<vmem>>, %arg3: memref<2x196x36xf32, #tpu.memory_space<vmem>>, %arg4: memref<36x16xf32, #tpu.memory_space<vmem>>, %arg5: memref<1x16xf32, #tpu.memory_space<vmem>>, %arg6: memref<2x4xf32, #tpu.memory_space<vmem>>, %arg7: memref<1x32xf32, #tpu.memory_space<vmem>>, %arg8: memref<1x16xf32, #tpu.memory_space<vmem>>, %arg9: memref<1x4xf32, #tpu.memory_space<vmem>>, %arg10: memref<1x1xf32, #tpu.memory_space<vmem>>, %arg11: memref<2x1xf32, #tpu.memory_space<vmem>>) attributes {dimension_semantics = [], scalar_prefetch = 0 : i64, scratch_operands = 0 : i64, tpu.core_type = #tpu.core_type<tc>} {
    %c0 = arith.constant 0 : index
    %c0_0 = arith.constant 0 : index
    %0 = vector.load %arg1[%c0, %c0_0] : memref<32x32xf32, #tpu.memory_space<vmem>>, vector<32x32xf32>
    %c0_1 = arith.constant 0 : index
    %c0_2 = arith.constant 0 : index
    %1 = vector.load %arg2[%c0_1, %c0_2] : memref<1x32xf32, #tpu.memory_space<vmem>>, vector<1x32xf32>
    %c0_3 = arith.constant 0 : index
    %c0_4 = arith.constant 0 : index
    %2 = vector.load %arg4[%c0_3, %c0_4] : memref<36x16xf32, #tpu.memory_space<vmem>>, vector<36x16xf32>
    %c0_5 = arith.constant 0 : index
    %c0_6 = arith.constant 0 : index
    %3 = vector.load %arg5[%c0_5, %c0_6] : memref<1x16xf32, #tpu.memory_space<vmem>>, vector<1x16xf32>
    %c0_7 = arith.constant 0 : index
    %c0_8 = arith.constant 0 : index
    %c0_9 = arith.constant 0 : index
    %4 = vector.load %arg0[%c0_7, %c0_8, %c0_9] : memref<2x8x32xf32, #tpu.memory_space<vmem>>, vector<1x8x32xf32>
    %5 = vector.shape_cast %4 : vector<1x8x32xf32> to vector<8x32xf32>
    %cst = arith.constant dense<0.000000e+00> : vector<8x32xf32>
    %6 = tpu.matmul %5, %0, %cst {dimension_numbers = #tpu.dot_dimension_numbers<[1], [0], [0], [1], [0, 0, 1, 1], [], []>} : vector<8x32xf32>, vector<32x32xf32>, vector<8x32xf32> -> vector<8x32xf32>
    %7 = vector.broadcast %1 : vector<1x32xf32> to vector<8x32xf32>
    %8 = arith.addf %6, %7 : vector<8x32xf32>
    %9 = math.tanh %8 : vector<8x32xf32>
    %cst_10 = arith.constant dense<0.000000e+00> : vector<32xf32>
    %10 = vector.multi_reduction <add>, %9, %cst_10 [0] : vector<8x32xf32> to vector<32xf32>
    %11 = vector.shape_cast %10 : vector<32xf32> to vector<1x32xf32>
    %cst_11 = arith.constant 8.000000e+00 : f32
    %12 = vector.broadcast %cst_11 : f32 to vector<1x32xf32>
    %13 = arith.divf %11, %12 : vector<1x32xf32>
    %c0_12 = arith.constant 0 : index
    %c0_13 = arith.constant 0 : index
    %c0_14 = arith.constant 0 : index
    %14 = vector.load %arg3[%c0_12, %c0_13, %c0_14] : memref<2x196x36xf32, #tpu.memory_space<vmem>>, vector<1x196x36xf32>
    %15 = vector.shape_cast %14 : vector<1x196x36xf32> to vector<196x36xf32>
    %cst_15 = arith.constant dense<0.000000e+00> : vector<196x16xf32>
    %16 = tpu.matmul %15, %2, %cst_15 {dimension_numbers = #tpu.dot_dimension_numbers<[1], [0], [0], [1], [0, 0, 1, 1], [], []>} : vector<196x36xf32>, vector<36x16xf32>, vector<196x16xf32> -> vector<196x16xf32>
    %17 = vector.broadcast %3 : vector<1x16xf32> to vector<196x16xf32>
    %18 = arith.addf %16, %17 : vector<196x16xf32>
    %cst_16 = arith.constant 0.000000e+00 : f32
    %19 = vector.broadcast %cst_16 : f32 to vector<196x16xf32>
    %20 = arith.maximumf %18, %19 : vector<196x16xf32>
    %cst_17 = arith.constant dense<0.000000e+00> : vector<16xf32>
    %21 = vector.multi_reduction <add>, %20, %cst_17 [0] : vector<196x16xf32> to vector<16xf32>
    %22 = vector.shape_cast %21 : vector<16xf32> to vector<1x16xf32>
    %cst_18 = arith.constant 1.960000e+02 : f32
    %23 = vector.broadcast %cst_18 : f32 to vector<1x16xf32>
    %24 = arith.divf %22, %23 : vector<1x16xf32>
    %c1 = arith.constant 1 : index
    %c0_19 = arith.constant 0 : index
    %c0_20 = arith.constant 0 : index
    %25 = vector.load %arg0[%c1, %c0_19, %c0_20] : memref<2x8x32xf32, #tpu.memory_space<vmem>>, vector<1x8x32xf32>
    %26 = vector.shape_cast %25 : vector<1x8x32xf32> to vector<8x32xf32>
    %cst_21 = arith.constant dense<0.000000e+00> : vector<8x32xf32>
    %27 = tpu.matmul %26, %0, %cst_21 {dimension_numbers = #tpu.dot_dimension_numbers<[1], [0], [0], [1], [0, 0, 1, 1], [], []>} : vector<8x32xf32>, vector<32x32xf32>, vector<8x32xf32> -> vector<8x32xf32>
    %28 = vector.broadcast %1 : vector<1x32xf32> to vector<8x32xf32>
    %29 = arith.addf %27, %28 : vector<8x32xf32>
    %30 = math.tanh %29 : vector<8x32xf32>
    %cst_22 = arith.constant dense<0.000000e+00> : vector<32xf32>
    %31 = vector.multi_reduction <add>, %30, %cst_22 [0] : vector<8x32xf32> to vector<32xf32>
    %32 = vector.shape_cast %31 : vector<32xf32> to vector<1x32xf32>
    %cst_23 = arith.constant 8.000000e+00 : f32
    %33 = vector.broadcast %cst_23 : f32 to vector<1x32xf32>
    %34 = arith.divf %32, %33 : vector<1x32xf32>
    %c1_24 = arith.constant 1 : index
    %c0_25 = arith.constant 0 : index
    %c0_26 = arith.constant 0 : index
    %35 = vector.load %arg3[%c1_24, %c0_25, %c0_26] : memref<2x196x36xf32, #tpu.memory_space<vmem>>, vector<1x196x36xf32>
    %36 = vector.shape_cast %35 : vector<1x196x36xf32> to vector<196x36xf32>
    %cst_27 = arith.constant dense<0.000000e+00> : vector<196x16xf32>
    %37 = tpu.matmul %36, %2, %cst_27 {dimension_numbers = #tpu.dot_dimension_numbers<[1], [0], [0], [1], [0, 0, 1, 1], [], []>} : vector<196x36xf32>, vector<36x16xf32>, vector<196x16xf32> -> vector<196x16xf32>
    %38 = vector.broadcast %3 : vector<1x16xf32> to vector<196x16xf32>
    %39 = arith.addf %37, %38 : vector<196x16xf32>
    %cst_28 = arith.constant 0.000000e+00 : f32
    %40 = vector.broadcast %cst_28 : f32 to vector<196x16xf32>
    %41 = arith.maximumf %39, %40 : vector<196x16xf32>
    %cst_29 = arith.constant dense<0.000000e+00> : vector<16xf32>
    %42 = vector.multi_reduction <add>, %41, %cst_29 [0] : vector<196x16xf32> to vector<16xf32>
    %43 = vector.shape_cast %42 : vector<16xf32> to vector<1x16xf32>
    %cst_30 = arith.constant 1.960000e+02 : f32
    %44 = vector.broadcast %cst_30 : f32 to vector<1x16xf32>
    %45 = arith.divf %43, %44 : vector<1x16xf32>
    %46 = tpu.concatenate %13, %34 in 0 : vector<1x32xf32>, vector<1x32xf32> -> vector<2x32xf32>
    %47 = tpu.concatenate %24, %45 in 0 : vector<1x16xf32>, vector<1x16xf32> -> vector<2x16xf32>
    %c0_31 = arith.constant 0 : index
    %c0_32 = arith.constant 0 : index
    %48 = vector.load %arg7[%c0_31, %c0_32] : memref<1x32xf32, #tpu.memory_space<vmem>>, vector<1x32xf32>
    %49 = vector.broadcast %48 : vector<1x32xf32> to vector<2x32xf32>
    %50 = arith.mulf %46, %49 : vector<2x32xf32>
    %cst_33 = arith.constant dense<0.000000e+00> : vector<2xf32>
    %51 = vector.multi_reduction <add>, %50, %cst_33 [1] : vector<2x32xf32> to vector<2xf32>
    %52 = vector.shape_cast %51 : vector<2xf32> to vector<2x1xf32>
    %c0_34 = arith.constant 0 : index
    %c0_35 = arith.constant 0 : index
    %53 = vector.load %arg8[%c0_34, %c0_35] : memref<1x16xf32, #tpu.memory_space<vmem>>, vector<1x16xf32>
    %54 = vector.broadcast %53 : vector<1x16xf32> to vector<2x16xf32>
    %55 = arith.mulf %47, %54 : vector<2x16xf32>
    %cst_36 = arith.constant dense<0.000000e+00> : vector<2xf32>
    %56 = vector.multi_reduction <add>, %55, %cst_36 [1] : vector<2x16xf32> to vector<2xf32>
    %57 = vector.shape_cast %56 : vector<2xf32> to vector<2x1xf32>
    %58 = arith.addf %52, %57 : vector<2x1xf32>
    %c0_37 = arith.constant 0 : index
    %c0_38 = arith.constant 0 : index
    %59 = vector.load %arg6[%c0_37, %c0_38] : memref<2x4xf32, #tpu.memory_space<vmem>>, vector<2x4xf32>
    %c0_39 = arith.constant 0 : index
    %c0_40 = arith.constant 0 : index
    %60 = vector.load %arg9[%c0_39, %c0_40] : memref<1x4xf32, #tpu.memory_space<vmem>>, vector<1x4xf32>
    %61 = vector.broadcast %60 : vector<1x4xf32> to vector<2x4xf32>
    %62 = arith.mulf %59, %61 : vector<2x4xf32>
    %cst_41 = arith.constant dense<0.000000e+00> : vector<2xf32>
    %63 = vector.multi_reduction <add>, %62, %cst_41 [1] : vector<2x4xf32> to vector<2xf32>
    %64 = vector.shape_cast %63 : vector<2xf32> to vector<2x1xf32>
    %65 = arith.addf %58, %64 : vector<2x1xf32>
    %c0_42 = arith.constant 0 : index
    %c0_43 = arith.constant 0 : index
    %66 = vector.load %arg10[%c0_42, %c0_43] : memref<1x1xf32, #tpu.memory_space<vmem>>, vector<1x1xf32>
    %67 = vector.broadcast %66 : vector<1x1xf32> to vector<2x1xf32>
    %68 = arith.addf %65, %67 : vector<2x1xf32>
    %c0_44 = arith.constant 0 : index
    %c0_45 = arith.constant 0 : index
    %69 = vector.load %arg11[%c0_44, %c0_45] : memref<2x1xf32, #tpu.memory_space<vmem>>, vector<2x1xf32>
    tpu.vector_store %arg11[%c0_44, %c0_45], %68 {strides = array<i32>} : memref<2x1xf32, #tpu.memory_space<vmem>>, vector<2x1xf32>,
    return
  }
}

</mosaic_0001>

<llo_original>
// kernel: ssl_multispec_forward.1
$region0: #{ssl_multispec_forward.1}
  #allocation0 [shape = 'u32[]', space=smem, size = 0x4, offset = 0x4, fixed_abs, tag = 'smem constant byte address 0x4 - core index']
  #allocation1 [shape = 'u32[144,128]{1,0:T(1,128)}', space=vmem, size = 0x12000, scoped, tag = 'internal scratch']
  #allocation2 [shape = 'f32[1,1]{1,0:T(1,128)S(1)}', space=vmem, size = 0x200, scoped, tag = 'scoped memory for ssl_multispec_forward.1']
  %s0 = inlined_call_operand.vmem [shape: f32[2,8,32], index: 0, kind: input, shape index: {}]
  %s1 = inlined_call_operand.vmem [shape: f32[32,32], index: 1, kind: input, shape index: {}]
  %s2 = inlined_call_operand.vmem [shape: f32[1,32], index: 2, kind: input, shape index: {}]
  %s3 = inlined_call_operand.vmem [shape: f32[2,196,36], index: 3, kind: input, shape index: {}]
  %s4 = inlined_call_operand.vmem [shape: f32[36,16], index: 4, kind: input, shape index: {}]
  %s5 = inlined_call_operand.vmem [shape: f32[1,16], index: 5, kind: input, shape index: {}]
  %s6 = inlined_call_operand.vmem [shape: f32[2,4], index: 6, kind: input, shape index: {}]
  %s7 = inlined_call_operand.vmem [shape: f32[1,32], index: 7, kind: input, shape index: {}]
  %s8 = inlined_call_operand.vmem [shape: f32[1,16], index: 8, kind: input, shape index: {}]
  %s9 = inlined_call_operand.vmem [shape: f32[1,4], index: 9, kind: input, shape index: {}]
  %s10 = inlined_call_operand.<no memory space> [shape: f32[1,1], index: 10, kind: input, shape index: {}]
  %s11 = inlined_call_operand.vmem [shape: f32[2,1], index: 11, kind: output, shape index: {}]
  %s12 = sld [smem:[#allocation0]]
  $region54: #{ssl_multispec_forward.1} parent=0
    _
  %s14 = ssub.s32 1, %s12
  %s15 = scalar_select 0, %s14, %s12
  %v16 = vstv %s10
  %17 = vst [vmem:[#allocation2] sm:$0x1] %v16
  // Predicated region
  $region2: #{ssl_multispec_forward.1} parent=0 // pred_check
    _
  $region3: #{ssl_multispec_forward.1} parent=0 // pred_check_branch
    %19 = sbr.rel (0) target = $region5
  $region4: #{ssl_multispec_forward.1} parent=0 // pred_region
    _
  $region5: #{ssl_multispec_forward.1} parent=0 // pred_fallthru
    _
  // Predicated region
  $region6: #{ssl_multispec_forward.1} parent=0 // pred_check
    _
  $region7: #{ssl_multispec_forward.1} parent=0 // pred_check_branch
    %21 = sbr.rel (0) target = $region9
  $region8: #{ssl_multispec_forward.1} parent=0 // pred_region
    _
  $region9: #{ssl_multispec_forward.1} parent=0 // pred_fallthru
    _
  // Predicated region
  $region10: #{ssl_multispec_forward.1} parent=0 // pred_check
    _
  $region11: #{ssl_multispec_forward.1} parent=0 // pred_check_branch
    %23 = sbr.rel (0) target = $region13
  $region12: #{ssl_multispec_forward.1} parent=0 // pred_region
    _
  $region13: #{ssl_multispec_forward.1} parent=0 // pred_fallthru
    _
  // Predicated region
  $region14: #{ssl_multispec_forward.1} parent=0 // pred_check
    _
  $region15: #{ssl_multispec_forward.1} parent=0 // pred_check_branch
    %25 = sbr.rel (0) target = $region17
  $region16: #{ssl_multispec_forward.1} parent=0 // pred_region
    _
  $region17: #{ssl_multispec_forward.1} parent=0 // pred_fallthru
    _
  // Predicated region
  $region18: #{ssl_multispec_forward.1} parent=0 // pred_check
    _
  $region19: #{ssl_multispec_forward.1} parent=0 // pred_check_branch
    %27 = sbr.rel (0) target = $region21
  $region20: #{ssl_multispec_forward.1} parent=0 // pred_region
    _
  $region21: #{ssl_multispec_forward.1} parent=0 // pred_fallthru
    _
  // Predicated region
  $region22: #{ssl_multispec_forward.1} parent=0 // pred_check
    _
  $region23: #{ssl_multispec_forward.1} parent=0 // pred_check_branch
    %29 = sbr.rel (0) target = $region25
  $region24: #{ssl_multispec_forward.1} parent=0 // pred_region
    _
  $region25: #{ssl_multispec_forward.1} parent=0 // pred_fallthru
    _
  // Predicated region
  $region26: #{ssl_multispec_forward.1} parent=0 // pred_check
    _
  $region27: #{ssl_multispec_forward.1} parent=0 // pred_check_branch
    %31 = sbr.rel (0) target = $region29
  $region28: #{ssl_multispec_forward.1} parent=0 // pred_region
    _
  $region29: #{ssl_multispec_forward.1} parent=0 // pred_fallthru
    _
  // Predicated region
  $region30: #{ssl_multispec_forward.1} parent=0 // pred_check
    _
  $region31: #{ssl_multispec_forward.1} parent=0 // pred_check_branch
    %33 = sbr.rel (0) target = $region33
  $region32: #{ssl_multispec_forward.1} parent=0 // pred_region
    _
  $region33: #{ssl_multispec_forward.1} parent=0 // pred_fallthru
    _
  // Predicated region
  $region34: #{ssl_multispec_forward.1} parent=0 // pred_check
    _
  $region35: #{ssl_multispec_forward.1} parent=0 // pred_check_branch
    %35 = sbr.rel (0) target = $region37
  $region36: #{ssl_multispec_forward.1} parent=0 // pred_region
    _
  $region37: #{ssl_multispec_forward.1} parent=0 // pred_fallthru
    _
  // Predicated region
  $region38: #{ssl_multispec_forward.1} parent=0 // pred_check
    _
  $region39: #{ssl_multispec_forward.1} parent=0 // pred_check_branch
    %37 = sbr.rel (0) target = $region41
  $region40: #{ssl_multispec_forward.1} parent=0 // pred_region
    _
  $region41: #{ssl_multispec_forward.1} parent=0 // pred_fallthru
    _
  // Predicated region
  $region42: #{ssl_multispec_forward.1} parent=0 // pred_check
    _
  $region43: #{ssl_multispec_forward.1} parent=0 // pred_check_branch
    %39 = sbr.rel (0) target = $region45
  $region44: #{ssl_multispec_forward.1} parent=0 // pred_region
    _
  $region45: #{ssl_multispec_forward.1} parent=0 // pred_fallthru
    _
  %v40 = vld [vmem:[%s1] sm:$0xff]
  %v41 = vld [vmem:[%s1 + $0x8] sm:$0xff]
  %v42 = vld [vmem:[%s1 + $0x10] sm:$0xff]
  %v43 = vld [vmem:[%s1 + $0x18] sm:$0xff]
  %v44 = vld [vmem:[%s2] sm:$0x1]
  %v45 = vld [vmem:[%s4] sm:$0xff]
  %v46 = vld [vmem:[%s4 + $0x8] sm:$0xff]
  %v47 = vld [vmem:[%s4 + $0x10] sm:$0xff]
  %v48 = vld [vmem:[%s4 + $0x18] sm:$0xff]
  %v49 = vld [vmem:[%s4 + $0x20] sm:$0xf]
  %v50 = vld [vmem:[%s5] sm:$0x1]
  %v51 = vld [vmem:[%s0] sm:$0xff]
  %v53 = vlaneseq
  %v54 = vshrl.u32 %v53, 7
  %v55 = vsub.s32 0, %v54
  %v56 = vrot.slane %v44, %v55
  %vm58 = vcmask 261120
  %v60 = vsel %vm58, %v51, 0
  %62 = vmatprep.subr.mxu0 0.0
  %63 = vmatpush1.msra.mxu0 0.0
  %64 = vmatprep.subr.mxu0 0.0
  %65 = vmatpush1.msra.mxu0 0.0
  %66 = vmatprep.subr.mxu0 0.0
  %67 = vmatpush1.msra.mxu0 0.0
  %68 = vmatprep.subr.mxu0 0.0
  %69 = vmatpush1.msra.mxu0 0.0
  %70 = vmatprep.subr.mxu0 0.0
  %71 = vmatpush1.msra.mxu0 0.0
  %72 = vmatprep.subr.mxu0 0.0
  %73 = vmatpush1.msra.mxu0 0.0
  %74 = vmatprep.subr.mxu0 0.0
  %75 = vmatpush1.msra.mxu0 0.0
  %76 = vmatprep.subr.mxu0 0.0
  %77 = vmatpush1.msra.mxu0 0.0
  %78 = vmatprep.subr.mxu0 0.0
  %79 = vmatpush1.msra.mxu0 0.0
  %80 = vmatprep.subr.mxu0 0.0
  %81 = vmatpush1.msra.mxu0 0.0
  %82 = vmatprep.subr.mxu0 0.0
  %83 = vmatpush1.msra.mxu0 0.0
  %84 = vmatprep.subr.mxu0 0.0
  %85 = vmatpush1.msra.mxu0 0.0
  %86 = vmatprep.subr.mxu0 0.0
  %87 = vmatpush1.msra.mxu0 %v43
  %88 = vmatprep.subr.mxu0 0.0
  %89 = vmatpush1.msra.mxu0 %v42
  %90 = vmatprep.subr.mxu0 0.0
  %91 = vmatpush1.msra.mxu0 %v41
  %92 = vmatprep.subr.mxu0 0.0
  %93 = vmatpush1.msra.mxu0 %v40
  %94 = vmatprep.subr.mxu0 0.0
  %95 = vmatpush2.msra.mxu0 0.0
  %96 = vmatprep.subr.mxu0 0.0
  %97 = vmatpush2.msra.mxu0 0.0
  %98 = vmatprep.subr.mxu0 0.0
  %99 = vmatpush2.msra.mxu0 0.0
  %100 = vmatprep.subr.mxu0 0.0
  %101 = vmatpush2.msra.mxu0 0.0
  %102 = vmatprep.subr.mxu0 0.0
  %103 = vmatpush2.msra.mxu0 0.0
  %104 = vmatprep.subr.mxu0 0.0
  %105 = vmatpush2.msra.mxu0 0.0
  %106 = vmatprep.subr.mxu0 0.0
  %107 = vmatpush2.msra.mxu0 0.0
  %108 = vmatprep.subr.mxu0 0.0
  %109 = vmatpush2.msra.mxu0 0.0
  %110 = vmatprep.subr.mxu0 0.0
  %111 = vmatpush2.msra.mxu0 0.0
  %112 = vmatprep.subr.mxu0 0.0
  %113 = vmatpush2.msra.mxu0 0.0
  %114 = vmatprep.subr.mxu0 0.0
  %115 = vmatpush2.msra.mxu0 0.0
  %116 = vmatprep.subr.mxu0 0.0
  %117 = vmatpush2.msra.mxu0 0.0
  %118 = vmatprep.subr.mxu0 0.0
  %119 = vmatpush2.msra.mxu0 0.0
  %120 = vmatprep.subr.mxu0 0.0
  %121 = vmatpush2.msra.mxu0 0.0
  %122 = vmatprep.subr.mxu0 0.0
  %123 = vmatpush2.msra.mxu0 0.0
  %124 = vmatprep.subr.mxu0 0.0
  %125 = vmatpush2.msra.mxu0 0.0
  %126 = vmatprep.mubr.f32.mxu0 0.0
  %127 = vmatmul.mubr.f32.gmra.mxu0 %v60
  %v128 = vpop.f32.mrf.mxu0
  %v129 = vadd.f32 %v56, %v128
  %v130 = vpop.f32.mrf.mxu0
  %131 = vdwg.mxu0
  %v132 = vtanh.pop %v129
  %v133 = vsel %vm58, %v132, 0.0
  %v134 = vrot.slane %v133, 4
  %v135 = vadd.f32 %v133, %v134
  %v136 = vrot.slane %v135, 2
  %v137 = vadd.f32 %v135, %v136
  %v138 = vrot.slane %v137, 1
  %v139 = vadd.f32 %v137, %v138
  %v140 = vrcp.pop 8.0
  %v141 = vmul.f32 %v139, %v140
  %v142 = vld [vmem:[%s3] sm:$0xff]
  %v143 = vld [vmem:[%s3 + $0x8] sm:$0xff]
  %v144 = vld [vmem:[%s3 + $0x10] sm:$0xff]
  %v145 = vld [vmem:[%s3 + $0x18] sm:$0xff]
  %v146 = vld [vmem:[%s3 + $0x20] sm:$0xff]
  %v147 = vld [vmem:[%s3 + $0x28] sm:$0xff]
  %v148 = vld [vmem:[%s3 + $0x30] sm:$0xff]
  %v149 = vld [vmem:[%s3 + $0x38] sm:$0xff]
  %v150 = vld [vmem:[%s3 + $0x40] sm:$0xff]
  %v151 = vld [vmem:[%s3 + $0x48] sm:$0xff]
  %v152 = vld [vmem:[%s3 + $0x50] sm:$0xff]
  %v153 = vld [vmem:[%s3 + $0x58] sm:$0xff]
  %v154 = vld [vmem:[%s3 + $0x60] sm:$0xff]
  %v155 = vld [vmem:[%s3 + $0x68] sm:$0xff]
  %v156 = vld [vmem:[%s3 + $0x70] sm:$0xff]
  %v157 = vld [vmem:[%s3 + $0x78] sm:$0xff]
  %v158 = vld [vmem:[%s3 + $0x80] sm:$0xff]
  %v159 = vld [vmem:[%s3 + $0x88] sm:$0xff]
  %v160 = vld [vmem:[%s3 + $0x90] sm:$0xff]
  %v161 = vld [vmem:[%s3 + $0x98] sm:$0xff]
  %v162 = vld [vmem:[%s3 + $0xa0] sm:$0xff]
  %v163 = vld [vmem:[%s3 + $0xa8] sm:$0xff]
  %v164 = vld [vmem:[%s3 + $0xb0] sm:$0xff]
  %v165 = vld [vmem:[%s3 + $0xb8] sm:$0xff]
  %v166 = vld [vmem:[%s3 + $0xc0] sm:$0xf]
  %v168 = vlaneseq
  %v169 = vshrl.u32 %v168, 7
  %v170 = vsub.s32 0, %v169
  %v171 = vrot.slane %v50, %v170
  %vm173 = vcmask 293888
  %v175 = vsel %vm173, %v142, 0
  %v178 = vsel %vm173, %v143, 0
  %v181 = vsel %vm173, %v144, 0
  %v184 = vsel %vm173, %v145, 0
  %v187 = vsel %vm173, %v146, 0
  %v190 = vsel %vm173, %v147, 0
  %v193 = vsel %vm173, %v148, 0
  %v196 = vsel %vm173, %v149, 0
  %v199 = vsel %vm173, %v150, 0
  %v202 = vsel %vm173, %v151, 0
  %v205 = vsel %vm173, %v152, 0
  %v208 = vsel %vm173, %v153, 0
  %v211 = vsel %vm173, %v154, 0
  %v214 = vsel %vm173, %v155, 0
  %v217 = vsel %vm173, %v156, 0
  %v220 = vsel %vm173, %v157, 0
  %v223 = vsel %vm173, %v158, 0
  %v226 = vsel %vm173, %v159, 0
  %v229 = vsel %vm173, %v160, 0
  %v232 = vsel %vm173, %v161, 0
  %v235 = vsel %vm173, %v162, 0
  %v238 = vsel %vm173, %v163, 0
  %v241 = vsel %vm173, %v164, 0
  %v244 = vsel %vm173, %v165, 0
  %v247 = vsel %vm173, %v166, 0
  %vm249 = vcmask 1043456
  %v251 = vsel %vm249, %v49, 0
  %253 = vmatprep.subr.mxu0 0.0
  %254 = vmatpush1.msra.mxu0 0.0
  %255 = vmatprep.subr.mxu0 0.0
  %256 = vmatpush1.msra.mxu0 0.0
  %257 = vmatprep.subr.mxu0 0.0
  %258 = vmatpush1.msra.mxu0 0.0
  %259 = vmatprep.subr.mxu0 0.0
  %260 = vmatpush1.msra.mxu0 0.0
  %261 = vmatprep.subr.mxu0 0.0
  %262 = vmatpush1.msra.mxu0 0.0
  %263 = vmatprep.subr.mxu0 0.0
  %264 = vmatpush1.msra.mxu0 0.0
  %265 = vmatprep.subr.mxu0 0.0
  %266 = vmatpush1.msra.mxu0 0.0
  %267 = vmatprep.subr.mxu0 0.0
  %268 = vmatpush1.msra.mxu0 0.0
  %269 = vmatprep.subr.mxu0 0.0
  %270 = vmatpush1.msra.mxu0 0.0
  %271 = vmatprep.subr.mxu0 0.0
  %272 = vmatpush1.msra.mxu0 0.0
  %273 = vmatprep.subr.mxu0 0.0
  %274 = vmatpush1.msra.mxu0 0.0
  %275 = vmatprep.subr.mxu0 0.0
  %276 = vmatpush1.msra.mxu0 %v251
  %277 = vmatprep.subr.mxu0 0.0
  %278 = vmatpush1.msra.mxu0 %v48
  %279 = vmatprep.subr.mxu0 0.0
  %280 = vmatpush1.msra.mxu0 %v47
  %281 = vmatprep.subr.mxu0 0.0
  %282 = vmatpush1.msra.mxu0 %v46
  %283 = vmatprep.subr.mxu0 0.0
  %284 = vmatpush1.msra.mxu0 %v45
  %285 = vmatprep.subr.mxu0 0.0
  %286 = vmatpush2.msra.mxu0 0.0
  %287 = vmatprep.subr.mxu0 0.0
  %288 = vmatpush2.msra.mxu0 0.0
  %289 = vmatprep.subr.mxu0 0.0
  %290 = vmatpush2.msra.mxu0 0.0
  %291 = vmatprep.subr.mxu0 0.0
  %292 = vmatpush2.msra.mxu0 0.0
  %293 = vmatprep.subr.mxu0 0.0
  %294 = vmatpush2.msra.mxu0 0.0
  %295 = vmatprep.subr.mxu0 0.0
  %296 = vmatpush2.msra.mxu0 0.0
  %297 = vmatprep.subr.mxu0 0.0
  %298 = vmatpush2.msra.mxu0 0.0
  %299 = vmatprep.subr.mxu0 0.0
  %300 = vmatpush2.msra.mxu0 0.0
  %301 = vmatprep.subr.mxu0 0.0
  %302 = vmatpush2.msra.mxu0 0.0
  %303 = vmatprep.subr.mxu0 0.0
  %304 = vmatpush2.msra.mxu0 0.0
  %305 = vmatprep.subr.mxu0 0.0
  %306 = vmatpush2.msra.mxu0 0.0
  %307 = vmatprep.subr.mxu0 0.0
  %308 = vmatpush2.msra.mxu0 0.0
  %309 = vmatprep.subr.mxu0 0.0
  %310 = vmatpush2.msra.mxu0 0.0
  %311 = vmatprep.subr.mxu0 0.0
  %312 = vmatpush2.msra.mxu0 0.0
  %313 = vmatprep.subr.mxu0 0.0
  %314 = vmatpush2.msra.mxu0 0.0
  %315 = vmatprep.subr.mxu0 0.0
  %316 = vmatpush2.msra.mxu0 0.0
  %317 = vmatprep.mubr.f32.mxu0 0.0
  %318 = vmatmul.mubr.f32.gmra.mxu0 %v175
  %v319 = vpop.f32.mrf.mxu0
  %v320 = vadd.f32 %v171, %v319
  %v321 = vpop.f32.mrf.mxu0
  %322 = vmatprep.mubr.f32.mxu0 0.0
  %323 = vmatmul.mubr.f32.gmra.mxu0 %v178
  %v324 = vpop.f32.mrf.mxu0
  %v325 = vadd.f32 %v171, %v324
  %v326 = vpop.f32.mrf.mxu0
  %327 = vmatprep.mubr.f32.mxu0 0.0
  %328 = vmatmul.mubr.f32.gmra.mxu0 %v181
  %v329 = vpop.f32.mrf.mxu0
  %v330 = vadd.f32 %v171, %v329
  %v331 = vpop.f32.mrf.mxu0
  %332 = vmatprep.mubr.f32.mxu0 0.0
  %333 = vmatmul.mubr.f32.gmra.mxu0 %v184
  %v334 = vpop.f32.mrf.mxu0
  %v335 = vadd.f32 %v171, %v334
  %v336 = vpop.f32.mrf.mxu0
  %337 = vmatprep.mubr.f32.mxu0 0.0
  %338 = vmatmul.mubr.f32.gmra.mxu0 %v187
  %v339 = vpop.f32.mrf.mxu0
  %v340 = vadd.f32 %v171, %v339
  %v341 = vpop.f32.mrf.mxu0
  %342 = vmatprep.mubr.f32.mxu0 0.0
  %343 = vmatmul.mubr.f32.gmra.mxu0 %v190
  %v344 = vpop.f32.mrf.mxu0
  %v345 = vadd.f32 %v171, %v344
  %v346 = vpop.f32.mrf.mxu0
  %347 = vmatprep.mubr.f32.mxu0 0.0
  %348 = vmatmul.mubr.f32.gmra.mxu0 %v193
  %v349 = vpop.f32.mrf.mxu0
  %v350 = vadd.f32 %v171, %v349
  %v351 = vpop.f32.mrf.mxu0
  %352 = vmatprep.mubr.f32.mxu0 0.0
  %353 = vmatmul.mubr.f32.gmra.mxu0 %v196
  %v354 = vpop.f32.mrf.mxu0
  %v355 = vadd.f32 %v171, %v354
  %v356 = vpop.f32.mrf.mxu0
  %357 = vmatprep.mubr.f32.mxu0 0.0
  %358 = vmatmul.mubr.f32.gmra.mxu0 %v199
  %v359 = vpop.f32.mrf.mxu0
  %v360 = vadd.f32 %v171, %v359
  %v361 = vpop.f32.mrf.mxu0
  %362 = vmatprep.mubr.f32.mxu0 0.0
  %363 = vmatmul.mubr.f32.gmra.mxu0 %v202
  %v364 = vpop.f32.mrf.mxu0
  %v365 = vadd.f32 %v171, %v364
  %v366 = vpop.f32.mrf.mxu0
  %367 = vmatprep.mubr.f32.mxu0 0.0
  %368 = vmatmul.mubr.f32.gmra.mxu0 %v205
  %v369 = vpop.f32.mrf.mxu0
  %v370 = vadd.f32 %v171, %v369
  %v371 = vpop.f32.mrf.mxu0
  %372 = vmatprep.mubr.f32.mxu0 0.0
  %373 = vmatmul.mubr.f32.gmra.mxu0 %v208
  %v374 = vpop.f32.mrf.mxu0
  %v375 = vadd.f32 %v171, %v374
  %v376 = vpop.f32.mrf.mxu0
  %377 = vmatprep.mubr.f32.mxu0 0.0
  %378 = vmatmul.mubr.f32.gmra.mxu0 %v211
  %v379 = vpop.f32.mrf.mxu0
  %v380 = vadd.f32 %v171, %v379
  %v381 = vpop.f32.mrf.mxu0
  %382 = vmatprep.mubr.f32.mxu0 0.0
  %383 = vmatmul.mubr.f32.gmra.mxu0 %v214
  %v384 = vpop.f32.mrf.mxu0
  %v385 = vadd.f32 %v171, %v384
  %v386 = vpop.f32.mrf.mxu0
  %387 = vmatprep.mubr.f32.mxu0 0.0
  %388 = vmatmul.mubr.f32.gmra.mxu0 %v217
  %v389 = vpop.f32.mrf.mxu0
  %v390 = vadd.f32 %v171, %v389
  %v391 = vpop.f32.mrf.mxu0
  %392 = vmatprep.mubr.f32.mxu0 0.0
  %393 = vmatmul.mubr.f32.gmra.mxu0 %v220
  %v394 = vpop.f32.mrf.mxu0
  %v395 = vadd.f32 %v171, %v394
  %v396 = vpop.f32.mrf.mxu0
  %397 = vmatprep.mubr.f32.mxu0 0.0
  %398 = vmatmul.mubr.f32.gmra.mxu0 %v223
  %v399 = vpop.f32.mrf.mxu0
  %v400 = vadd.f32 %v171, %v399
  %v401 = vpop.f32.mrf.mxu0
  %402 = vmatprep.mubr.f32.mxu0 0.0
  %403 = vmatmul.mubr.f32.gmra.mxu0 %v226
  %v404 = vpop.f32.mrf.mxu0
  %v405 = vadd.f32 %v171, %v404
  %v406 = vpop.f32.mrf.mxu0
  %407 = vmatprep.mubr.f32.mxu0 0.0
  %408 = vmatmul.mubr.f32.gmra.mxu0 %v229
  %v409 = vpop.f32.mrf.mxu0
  %v410 = vadd.f32 %v171, %v409
  %v411 = vpop.f32.mrf.mxu0
  %412 = vmatprep.mubr.f32.mxu0 0.0
  %413 = vmatmul.mubr.f32.gmra.mxu0 %v232
  %v414 = vpop.f32.mrf.mxu0
  %v415 = vadd.f32 %v171, %v414
  %v416 = vpop.f32.mrf.mxu0
  %417 = vmatprep.mubr.f32.mxu0 0.0
  %418 = vmatmul.mubr.f32.gmra.mxu0 %v235
  %v419 = vpop.f32.mrf.mxu0
  %v420 = vadd.f32 %v171, %v419
  %v421 = vpop.f32.mrf.mxu0
  %422 = vmatprep.mubr.f32.mxu0 0.0
  %423 = vmatmul.mubr.f32.gmra.mxu0 %v238
  %v424 = vpop.f32.mrf.mxu0
  %v425 = vadd.f32 %v171, %v424
  %v426 = vpop.f32.mrf.mxu0
  %427 = vmatprep.mubr.f32.mxu0 0.0
  %428 = vmatmul.mubr.f32.gmra.mxu0 %v241
  %v429 = vpop.f32.mrf.mxu0
  %v430 = vadd.f32 %v171, %v429
  %v431 = vpop.f32.mrf.mxu0
  %432 = vmatprep.mubr.f32.mxu0 0.0
  %433 = vmatmul.mubr.f32.gmra.mxu0 %v244
  %v434 = vpop.f32.mrf.mxu0
  %v435 = vadd.f32 %v171, %v434
  %v436 = vpop.f32.mrf.mxu0
  %437 = vmatprep.mubr.f32.mxu0 0.0
  %438 = vmatmul.mubr.f32.gmra.mxu0 %v247
  %v439 = vpop.f32.mrf.mxu0
  %v440 = vadd.f32 %v171, %v439
  %v441 = vpop.f32.mrf.mxu0
  %442 = vdwg.mxu0
  %v443 = vmax.f32 %v320, 0.0
  %v444 = vmax.f32 %v325, 0.0
  %v445 = vmax.f32 %v330, 0.0
  %v446 = vmax.f32 %v335, 0.0
  %v447 = vmax.f32 %v340, 0.0
  %v448 = vmax.f32 %v345, 0.0
  %v449 = vmax.f32 %v350, 0.0
  %v450 = vmax.f32 %v355, 0.0
  %v451 = vmax.f32 %v360, 0.0
  %v452 = vmax.f32 %v365, 0.0
  %v453 = vmax.f32 %v370, 0.0
  %v454 = vmax.f32 %v375, 0.0
  %v455 = vmax.f32 %v380, 0.0
  %v456 = vmax.f32 %v385, 0.0
  %v457 = vmax.f32 %v390, 0.0
  %v458 = vmax.f32 %v395, 0.0
  %v459 = vmax.f32 %v400, 0.0
  %v460 = vmax.f32 %v405, 0.0
  %v461 = vmax.f32 %v410, 0.0
  %v462 = vmax.f32 %v415, 0.0
  %v463 = vmax.f32 %v420, 0.0
  %v464 = vmax.f32 %v425, 0.0
  %v465 = vmax.f32 %v430, 0.0
  %v466 = vmax.f32 %v435, 0.0
  %v467 = vmax.f32 %v440, 0.0
  %vm468 = vcmask 130048
  %v469 = vsel %vm468, %v443, 0.0
  %v470 = vsel %vm468, %v444, 0.0
  %v471 = vadd.f32 %v469, %v470
  %v472 = vsel %vm468, %v445, 0.0
  %v473 = vadd.f32 %v471, %v472
  %v474 = vsel %vm468, %v446, 0.0
  %v475 = vadd.f32 %v473, %v474
  %v476 = vsel %vm468, %v447, 0.0
  %v477 = vadd.f32 %v475, %v476
  %v478 = vsel %vm468, %v448, 0.0
  %v479 = vadd.f32 %v477, %v478
  %v480 = vsel %vm468, %v449, 0.0
  %v481 = vadd.f32 %v479, %v480
  %v482 = vsel %vm468, %v450, 0.0
  %v483 = vadd.f32 %v481, %v482
  %v484 = vsel %vm468, %v451, 0.0
  %v485 = vadd.f32 %v483, %v484
  %v486 = vsel %vm468, %v452, 0.0
  %v487 = vadd.f32 %v485, %v486
  %v488 = vsel %vm468, %v453, 0.0
  %v489 = vadd.f32 %v487, %v488
  %v490 = vsel %vm468, %v454, 0.0
  %v491 = vadd.f32 %v489, %v490
  %v492 = vsel %vm468, %v455, 0.0
  %v493 = vadd.f32 %v491, %v492
  %v494 = vsel %vm468, %v456, 0.0
  %v495 = vadd.f32 %v493, %v494
  %v496 = vsel %vm468, %v457, 0.0
  %v497 = vadd.f32 %v495, %v496
  %v498 = vsel %vm468, %v458, 0.0
  %v499 = vadd.f32 %v497, %v498
  %v500 = vsel %vm468, %v459, 0.0
  %v501 = vadd.f32 %v499, %v500
  %v502 = vsel %vm468, %v460, 0.0
  %v503 = vadd.f32 %v501, %v502
  %v504 = vsel %vm468, %v461, 0.0
  %v505 = vadd.f32 %v503, %v504
  %v506 = vsel %vm468, %v462, 0.0
  %v507 = vadd.f32 %v505, %v506
  %v508 = vsel %vm468, %v463, 0.0
  %v509 = vadd.f32 %v507, %v508
  %v510 = vsel %vm468, %v464, 0.0
  %v511 = vadd.f32 %v509, %v510
  %v512 = vsel %vm468, %v465, 0.0
  %v513 = vadd.f32 %v511, %v512
  %v514 = vsel %vm468, %v466, 0.0
  %v515 = vadd.f32 %v513, %v514
  %vm516 = vcmask 125952
  %v517 = vsel %vm516, %v467, 0.0
  %v518 = vadd.f32 %v515, %v517
  %v519 = vrot.slane %v518, 4
  %v520 = vadd.f32 %v518, %v519
  %v521 = vrot.slane %v520, 2
  %v522 = vadd.f32 %v520, %v521
  %v523 = vrot.slane %v522, 1
  %v524 = vadd.f32 %v522, %v523
  %v525 = vrcp.pop 196.0
  %v526 = vmul.f32 %v524, %v525
  %s527 = scalar_lea.vmem %s0, 8
  %v528 = vld [vmem:[%s527] sm:$0xff]
  %v530 = vsel %vm58, %v528, 0
  %532 = vmatprep.subr.mxu0 0.0
  %533 = vmatpush1.msra.mxu0 0.0
  %534 = vmatprep.subr.mxu0 0.0
  %535 = vmatpush1.msra.mxu0 0.0
  %536 = vmatprep.subr.mxu0 0.0
  %537 = vmatpush1.msra.mxu0 0.0
  %538 = vmatprep.subr.mxu0 0.0
  %539 = vmatpush1.msra.mxu0 0.0
  %540 = vmatprep.subr.mxu0 0.0
  %541 = vmatpush1.msra.mxu0 0.0
  %542 = vmatprep.subr.mxu0 0.0
  %543 = vmatpush1.msra.mxu0 0.0
  %544 = vmatprep.subr.mxu0 0.0
  %545 = vmatpush1.msra.mxu0 0.0
  %546 = vmatprep.subr.mxu0 0.0
  %547 = vmatpush1.msra.mxu0 0.0
  %548 = vmatprep.subr.mxu0 0.0
  %549 = vmatpush1.msra.mxu0 0.0
  %550 = vmatprep.subr.mxu0 0.0
  %551 = vmatpush1.msra.mxu0 0.0
  %552 = vmatprep.subr.mxu0 0.0
  %553 = vmatpush1.msra.mxu0 0.0
  %554 = vmatprep.subr.mxu0 0.0
  %555 = vmatpush1.msra.mxu0 0.0
  %556 = vmatprep.subr.mxu0 0.0
  %557 = vmatpush1.msra.mxu0 %v43
  %558 = vmatprep.subr.mxu0 0.0
  %559 = vmatpush1.msra.mxu0 %v42
  %560 = vmatprep.subr.mxu0 0.0
  %561 = vmatpush1.msra.mxu0 %v41
  %562 = vmatprep.subr.mxu0 0.0
  %563 = vmatpush1.msra.mxu0 %v40
  %564 = vmatprep.subr.mxu0 0.0
  %565 = vmatpush2.msra.mxu0 0.0
  %566 = vmatprep.subr.mxu0 0.0
  %567 = vmatpush2.msra.mxu0 0.0
  %568 = vmatprep.subr.mxu0 0.0
  %569 = vmatpush2.msra.mxu0 0.0
  %570 = vmatprep.subr.mxu0 0.0
  %571 = vmatpush2.msra.mxu0 0.0
  %572 = vmatprep.subr.mxu0 0.0
  %573 = vmatpush2.msra.mxu0 0.0
  %574 = vmatprep.subr.mxu0 0.0
  %575 = vmatpush2.msra.mxu0 0.0
  %576 = vmatprep.subr.mxu0 0.0
  %577 = vmatpush2.msra.mxu0 0.0
  %578 = vmatprep.subr.mxu0 0.0
  %579 = vmatpush2.msra.mxu0 0.0
  %580 = vmatprep.subr.mxu0 0.0
  %581 = vmatpush2.msra.mxu0 0.0
  %582 = vmatprep.subr.mxu0 0.0
  %583 = vmatpush2.msra.mxu0 0.0
  %584 = vmatprep.subr.mxu0 0.0
  %585 = vmatpush2.msra.mxu0 0.0
  %586 = vmatprep.subr.mxu0 0.0
  %587 = vmatpush2.msra.mxu0 0.0
  %588 = vmatprep.subr.mxu0 0.0
  %589 = vmatpush2.msra.mxu0 0.0
  %590 = vmatprep.subr.mxu0 0.0
  %591 = vmatpush2.msra.mxu0 0.0
  %592 = vmatprep.subr.mxu0 0.0
  %593 = vmatpush2.msra.mxu0 0.0
  %594 = vmatprep.subr.mxu0 0.0
  %595 = vmatpush2.msra.mxu0 0.0
  %596 = vmatprep.mubr.f32.mxu0 0.0
  %597 = vmatmul.mubr.f32.gmra.mxu0 %v530
  %v598 = vpop.f32.mrf.mxu0
  %v599 = vadd.f32 %v56, %v598
  %v600 = vpop.f32.mrf.mxu0
  %601 = vdwg.mxu0
  %v602 = vtanh.pop %v599
  %v603 = vsel %vm58, %v602, 0.0
  %v604 = vrot.slane %v603, 4
  %v605 = vadd.f32 %v603, %v604
  %v606 = vrot.slane %v605, 2
  %v607 = vadd.f32 %v605, %v606
  %v608 = vrot.slane %v607, 1
  %v609 = vadd.f32 %v607, %v608
  %v610 = vmul.f32 %v609, %v140
  %s611 = scalar_lea.vmem %s3, 200
  %v612 = vld [vmem:[%s611] sm:$0xff]
  %v613 = vld [vmem:[%s611 + $0x8] sm:$0xff]
  %v614 = vld [vmem:[%s611 + $0x10] sm:$0xff]
  %v615 = vld [vmem:[%s611 + $0x18] sm:$0xff]
  %v616 = vld [vmem:[%s611 + $0x20] sm:$0xff]
  %v617 = vld [vmem:[%s611 + $0x28] sm:$0xff]
  %v618 = vld [vmem:[%s611 + $0x30] sm:$0xff]
  %v619 = vld [vmem:[%s611 + $0x38] sm:$0xff]
  %v620 = vld [vmem:[%s611 + $0x40] sm:$0xff]
  %v621 = vld [vmem:[%s611 + $0x48] sm:$0xff]
  %v622 = vld [vmem:[%s611 + $0x50] sm:$0xff]
  %v623 = vld [vmem:[%s611 + $0x58] sm:$0xff]
  %v624 = vld [vmem:[%s611 + $0x60] sm:$0xff]
  %v625 = vld [vmem:[%s611 + $0x68] sm:$0xff]
  %v626 = vld [vmem:[%s611 + $0x70] sm:$0xff]
  %v627 = vld [vmem:[%s611 + $0x78] sm:$0xff]
  %v628 = vld [vmem:[%s611 + $0x80] sm:$0xff]
  %v629 = vld [vmem:[%s611 + $0x88] sm:$0xff]
  %v630 = vld [vmem:[%s611 + $0x90] sm:$0xff]
  %v631 = vld [vmem:[%s611 + $0x98] sm:$0xff]
  %v632 = vld [vmem:[%s611 + $0xa0] sm:$0xff]
  %v633 = vld [vmem:[%s611 + $0xa8] sm:$0xff]
  %v634 = vld [vmem:[%s611 + $0xb0] sm:$0xff]
  %v635 = vld [vmem:[%s611 + $0xb8] sm:$0xff]
  %v636 = vld [vmem:[%s611 + $0xc0] sm:$0xf]
  %v638 = vsel %vm173, %v612, 0
  %v641 = vsel %vm173, %v613, 0
  %v644 = vsel %vm173, %v614, 0
  %v647 = vsel %vm173, %v615, 0
  %v650 = vsel %vm173, %v616, 0
  %v653 = vsel %vm173, %v617, 0
  %v656 = vsel %vm173, %v618, 0
  %v659 = vsel %vm173, %v619, 0
  %v662 = vsel %vm173, %v620, 0
  %v665 = vsel %vm173, %v621, 0
  %v668 = vsel %vm173, %v622, 0
  %v671 = vsel %vm173, %v623, 0
  %v674 = vsel %vm173, %v624, 0
  %v677 = vsel %vm173, %v625, 0
  %v680 = vsel %vm173, %v626, 0
  %v683 = vsel %vm173, %v627, 0
  %v686 = vsel %vm173, %v628, 0
  %v689 = vsel %vm173, %v629, 0
  %v692 = vsel %vm173, %v630, 0
  %v695 = vsel %vm173, %v631, 0
  %v698 = vsel %vm173, %v632, 0
  %v701 = vsel %vm173, %v633, 0
  %v704 = vsel %vm173, %v634, 0
  %v707 = vsel %vm173, %v635, 0
  %v710 = vsel %vm173, %v636, 0
  %712 = vmatprep.subr.mxu0 0.0
  %713 = vmatpush1.msra.mxu0 0.0
  %714 = vmatprep.subr.mxu0 0.0
  %715 = vmatpush1.msra.mxu0 0.0
  %716 = vmatprep.subr.mxu0 0.0
  %717 = vmatpush1.msra.mxu0 0.0
  %718 = vmatprep.subr.mxu0 0.0
  %719 = vmatpush1.msra.mxu0 0.0
  %720 = vmatprep.subr.mxu0 0.0
  %721 = vmatpush1.msra.mxu0 0.0
  %722 = vmatprep.subr.mxu0 0.0
  %723 = vmatpush1.msra.mxu0 0.0
  %724 = vmatprep.subr.mxu0 0.0
  %725 = vmatpush1.msra.mxu0 0.0
  %726 = vmatprep.subr.mxu0 0.0
  %727 = vmatpush1.msra.mxu0 0.0
  %728 = vmatprep.subr.mxu0 0.0
  %729 = vmatpush1.msra.mxu0 0.0
  %730 = vmatprep.subr.mxu0 0.0
  %731 = vmatpush1.msra.mxu0 0.0
  %732 = vmatprep.subr.mxu0 0.0
  %733 = vmatpush1.msra.mxu0 0.0
  %734 = vmatprep.subr.mxu0 0.0
  %735 = vmatpush1.msra.mxu0 %v251
  %736 = vmatprep.subr.mxu0 0.0
  %737 = vmatpush1.msra.mxu0 %v48
  %738 = vmatprep.subr.mxu0 0.0
  %739 = vmatpush1.msra.mxu0 %v47
  %740 = vmatprep.subr.mxu0 0.0
  %741 = vmatpush1.msra.mxu0 %v46
  %742 = vmatprep.subr.mxu0 0.0
  %743 = vmatpush1.msra.mxu0 %v45
  %744 = vmatprep.subr.mxu0 0.0
  %745 = vmatpush2.msra.mxu0 0.0
  %746 = vmatprep.subr.mxu0 0.0
  %747 = vmatpush2.msra.mxu0 0.0
  %748 = vmatprep.subr.mxu0 0.0
  %749 = vmatpush2.msra.mxu0 0.0
  %750 = vmatprep.subr.mxu0 0.0
  %751 = vmatpush2.msra.mxu0 0.0
  %752 = vmatprep.subr.mxu0 0.0
  %753 = vmatpush2.msra.mxu0 0.0
  %754 = vmatprep.subr.mxu0 0.0
  %755 = vmatpush2.msra.mxu0 0.0
  %756 = vmatprep.subr.mxu0 0.0
  %757 = vmatpush2.msra.mxu0 0.0
  %758 = vmatprep.subr.mxu0 0.0
  %759 = vmatpush2.msra.mxu0 0.0
  %760 = vmatprep.subr.mxu0 0.0
  %761 = vmatpush2.msra.mxu0 0.0
  %762 = vmatprep.subr.mxu0 0.0
  %763 = vmatpush2.msra.mxu0 0.0
  %764 = vmatprep.subr.mxu0 0.0
  %765 = vmatpush2.msra.mxu0 0.0
  %766 = vmatprep.subr.mxu0 0.0
  %767 = vmatpush2.msra.mxu0 0.0
  %768 = vmatprep.subr.mxu0 0.0
  %769 = vmatpush2.msra.mxu0 0.0
  %770 = vmatprep.subr.mxu0 0.0
  %771 = vmatpush2.msra.mxu0 0.0
  %772 = vmatprep.subr.mxu0 0.0
  %773 = vmatpush2.msra.mxu0 0.0
  %774 = vmatprep.subr.mxu0 0.0
  %775 = vmatpush2.msra.mxu0 0.0
  %776 = vmatprep.mubr.f32.mxu0 0.0
  %777 = vmatmul.mubr.f32.gmra.mxu0 %v638
  %v778 = vpop.f32.mrf.mxu0
  %v779 = vadd.f32 %v171, %v778
  %v780 = vpop.f32.mrf.mxu0
  %781 = vmatprep.mubr.f32.mxu0 0.0
  %782 = vmatmul.mubr.f32.gmra.mxu0 %v641
  %v783 = vpop.f32.mrf.mxu0
  %v784 = vadd.f32 %v171, %v783
  %v785 = vpop.f32.mrf.mxu0
  %786 = vmatprep.mubr.f32.mxu0 0.0
  %787 = vmatmul.mubr.f32.gmra.mxu0 %v644
  %v788 = vpop.f32.mrf.mxu0
  %v789 = vadd.f32 %v171, %v788
  %v790 = vpop.f32.mrf.mxu0
  %791 = vmatprep.mubr.f32.mxu0 0.0
  %792 = vmatmul.mubr.f32.gmra.mxu0 %v647
  %v793 = vpop.f32.mrf.mxu0
  %v794 = vadd.f32 %v171, %v793
  %v795 = vpop.f32.mrf.mxu0
  %796 = vmatprep.mubr.f32.mxu0 0.0
  %797 = vmatmul.mubr.f32.gmra.mxu0 %v650
  %v798 = vpop.f32.mrf.mxu0
  %v799 = vadd.f32 %v171, %v798
  %v800 = vpop.f32.mrf.mxu0
  %801 = vmatprep.mubr.f32.mxu0 0.0
  %802 = vmatmul.mubr.f32.gmra.mxu0 %v653
  %v803 = vpop.f32.mrf.mxu0
  %v804 = vadd.f32 %v171, %v803
  %v805 = vpop.f32.mrf.mxu0
  %806 = vmatprep.mubr.f32.mxu0 0.0
  %807 = vmatmul.mubr.f32.gmra.mxu0 %v656
  %v808 = vpop.f32.mrf.mxu0
  %v809 = vadd.f32 %v171, %v808
  %v810 = vpop.f32.mrf.mxu0
  %811 = vmatprep.mubr.f32.mxu0 0.0
  %812 = vmatmul.mubr.f32.gmra.mxu0 %v659
  %v813 = vpop.f32.mrf.mxu0
  %v814 = vadd.f32 %v171, %v813
  %v815 = vpop.f32.mrf.mxu0
  %816 = vmatprep.mubr.f32.mxu0 0.0
  %817 = vmatmul.mubr.f32.gmra.mxu0 %v662
  %v818 = vpop.f32.mrf.mxu0
  %v819 = vadd.f32 %v171, %v818
  %v820 = vpop.f32.mrf.mxu0
  %821 = vmatprep.mubr.f32.mxu0 0.0
  %822 = vmatmul.mubr.f32.gmra.mxu0 %v665
  %v823 = vpop.f32.mrf.mxu0
  %v824 = vadd.f32 %v171, %v823
  %v825 = vpop.f32.mrf.mxu0
  %826 = vmatprep.mubr.f32.mxu0 0.0
  %827 = vmatmul.mubr.f32.gmra.mxu0 %v668
  %v828 = vpop.f32.mrf.mxu0
  %v829 = vadd.f32 %v171, %v828
  %v830 = vpop.f32.mrf.mxu0
  %831 = vmatprep.mubr.f32.mxu0 0.0
  %832 = vmatmul.mubr.f32.gmra.mxu0 %v671
  %v833 = vpop.f32.mrf.mxu0
  %v834 = vadd.f32 %v171, %v833
  %v835 = vpop.f32.mrf.mxu0
  %836 = vmatprep.mubr.f32.mxu0 0.0
  %837 = vmatmul.mubr.f32.gmra.mxu0 %v674
  %v838 = vpop.f32.mrf.mxu0
  %v839 = vadd.f32 %v171, %v838
  %v840 = vpop.f32.mrf.mxu0
  %841 = vmatprep.mubr.f32.mxu0 0.0
  %842 = vmatmul.mubr.f32.gmra.mxu0 %v677
  %v843 = vpop.f32.mrf.mxu0
  %v844 = vadd.f32 %v171, %v843
  %v845 = vpop.f32.mrf.mxu0
  %846 = vmatprep.mubr.f32.mxu0 0.0
  %847 = vmatmul.mubr.f32.gmra.mxu0 %v680
  %v848 = vpop.f32.mrf.mxu0
  %v849 = vadd.f32 %v171, %v848
  %v850 = vpop.f32.mrf.mxu0
  %851 = vmatprep.mubr.f32.mxu0 0.0
  %852 = vmatmul.mubr.f32.gmra.mxu0 %v683
  %v853 = vpop.f32.mrf.mxu0
  %v854 = vadd.f32 %v171, %v853
  %v855 = vpop.f32.mrf.mxu0
  %856 = vmatprep.mubr.f32.mxu0 0.0
  %857 = vmatmul.mubr.f32.gmra.mxu0 %v686
  %v858 = vpop.f32.mrf.mxu0
  %v859 = vadd.f32 %v171, %v858
  %v860 = vpop.f32.mrf.mxu0
  %861 = vmatprep.mubr.f32.mxu0 0.0
  %862 = vmatmul.mubr.f32.gmra.mxu0 %v689
  %v863 = vpop.f32.mrf.mxu0
  %v864 = vadd.f32 %v171, %v863
  %v865 = vpop.f32.mrf.mxu0
  %866 = vmatprep.mubr.f32.mxu0 0.0
  %867 = vmatmul.mubr.f32.gmra.mxu0 %v692
  %v868 = vpop.f32.mrf.mxu0
  %v869 = vadd.f32 %v171, %v868
  %v870 = vpop.f32.mrf.mxu0
  %871 = vmatprep.mubr.f32.mxu0 0.0
  %872 = vmatmul.mubr.f32.gmra.mxu0 %v695
  %v873 = vpop.f32.mrf.mxu0
  %v874 = vadd.f32 %v171, %v873
  %v875 = vpop.f32.mrf.mxu0
  %876 = vmatprep.mubr.f32.mxu0 0.0
  %877 = vmatmul.mubr.f32.gmra.mxu0 %v698
  %v878 = vpop.f32.mrf.mxu0
  %v879 = vadd.f32 %v171, %v878
  %v880 = vpop.f32.mrf.mxu0
  %881 = vmatprep.mubr.f32.mxu0 0.0
  %882 = vmatmul.mubr.f32.gmra.mxu0 %v701
  %v883 = vpop.f32.mrf.mxu0
  %v884 = vadd.f32 %v171, %v883
  %v885 = vpop.f32.mrf.mxu0
  %886 = vmatprep.mubr.f32.mxu0 0.0
  %887 = vmatmul.mubr.f32.gmra.mxu0 %v704
  %v888 = vpop.f32.mrf.mxu0
  %v889 = vadd.f32 %v171, %v888
  %v890 = vpop.f32.mrf.mxu0
  %891 = vmatprep.mubr.f32.mxu0 0.0
  %892 = vmatmul.mubr.f32.gmra.mxu0 %v707
  %v893 = vpop.f32.mrf.mxu0
  %v894 = vadd.f32 %v171, %v893
  %v895 = vpop.f32.mrf.mxu0
  %896 = vmatprep.mubr.f32.mxu0 0.0
  %897 = vmatmul.mubr.f32.gmra.mxu0 %v710
  %v898 = vpop.f32.mrf.mxu0
  %v899 = vadd.f32 %v171, %v898
  %v900 = vpop.f32.mrf.mxu0
  %901 = vdwg.mxu0
  %v902 = vmax.f32 %v779, 0.0
  %v903 = vmax.f32 %v784, 0.0
  %v904 = vmax.f32 %v789, 0.0
  %v905 = vmax.f32 %v794, 0.0
  %v906 = vmax.f32 %v799, 0.0
  %v907 = vmax.f32 %v804, 0.0
  %v908 = vmax.f32 %v809, 0.0
  %v909 = vmax.f32 %v814, 0.0
  %v910 = vmax.f32 %v819, 0.0
  %v911 = vmax.f32 %v824, 0.0
  %v912 = vmax.f32 %v829, 0.0
  %v913 = vmax.f32 %v834, 0.0
  %v914 = vmax.f32 %v839, 0.0
  %v915 = vmax.f32 %v844, 0.0
  %v916 = vmax.f32 %v849, 0.0
  %v917 = vmax.f32 %v854, 0.0
  %v918 = vmax.f32 %v859, 0.0
  %v919 = vmax.f32 %v864, 0.0
  %v920 = vmax.f32 %v869, 0.0
  %v921 = vmax.f32 %v874, 0.0
  %v922 = vmax.f32 %v879, 0.0
  %v923 = vmax.f32 %v884, 0.0
  %v924 = vmax.f32 %v889, 0.0
  %v925 = vmax.f32 %v894, 0.0
  %v926 = vmax.f32 %v899, 0.0
  %v927 = vsel %vm468, %v902, 0.0
  %v928 = vsel %vm468, %v903, 0.0
  %v929 = vadd.f32 %v927, %v928
  %v930 = vsel %vm468, %v904, 0.0
  %v931 = vadd.f32 %v929, %v930
  %v932 = vsel %vm468, %v905, 0.0
  %v933 = vadd.f32 %v931, %v932
  %v934 = vsel %vm468, %v906, 0.0
  %v935 = vadd.f32 %v933, %v934
  %v936 = vsel %vm468, %v907, 0.0
  %v937 = vadd.f32 %v935, %v936
  %v938 = vsel %vm468, %v908, 0.0
  %v939 = vadd.f32 %v937, %v938
  %v940 = vsel %vm468, %v909, 0.0
  %v941 = vadd.f32 %v939, %v940
  %v942 = vsel %vm468, %v910, 0.0
  %v943 = vadd.f32 %v941, %v942
  %v944 = vsel %vm468, %v911, 0.0
  %v945 = vadd.f32 %v943, %v944
  %v946 = vsel %vm468, %v912, 0.0
  %v947 = vadd.f32 %v945, %v946
  %v948 = vsel %vm468, %v913, 0.0
  %v949 = vadd.f32 %v947, %v948
  %v950 = vsel %vm468, %v914, 0.0
  %v951 = vadd.f32 %v949, %v950
  %v952 = vsel %vm468, %v915, 0.0
  %v953 = vadd.f32 %v951, %v952
  %v954 = vsel %vm468, %v916, 0.0
  %v955 = vadd.f32 %v953, %v954
  %v956 = vsel %vm468, %v917, 0.0
  %v957 = vadd.f32 %v955, %v956
  %v958 = vsel %vm468, %v918, 0.0
  %v959 = vadd.f32 %v957, %v958
  %v960 = vsel %vm468, %v919, 0.0
  %v961 = vadd.f32 %v959, %v960
  %v962 = vsel %vm468, %v920, 0.0
  %v963 = vadd.f32 %v961, %v962
  %v964 = vsel %vm468, %v921, 0.0
  %v965 = vadd.f32 %v963, %v964
  %v966 = vsel %vm468, %v922, 0.0
  %v967 = vadd.f32 %v965, %v966
  %v968 = vsel %vm468, %v923, 0.0
  %v969 = vadd.f32 %v967, %v968
  %v970 = vsel %vm468, %v924, 0.0
  %v971 = vadd.f32 %v969, %v970
  %v972 = vsel %vm468, %v925, 0.0
  %v973 = vadd.f32 %v971, %v972
  %v974 = vsel %vm516, %v926, 0.0
  %v975 = vadd.f32 %v973, %v974
  %v976 = vrot.slane %v975, 4
  %v977 = vadd.f32 %v975, %v976
  %v978 = vrot.slane %v977, 2
  %v979 = vadd.f32 %v977, %v978
  %v980 = vrot.slane %v979, 1
  %v981 = vadd.f32 %v979, %v980
  %v982 = vmul.f32 %v981, %v525
  %vm983 = vcmask 1040384
  %v984 = vsel %vm983, %v141, %v610
  %v985 = vsel %vm983, %v526, %v982
  %v986 = vld [vmem:[%s7] sm:$0x1]
  %v988 = vlaneseq
  %v989 = vshrl.u32 %v988, 7
  %v990 = vsub.s32 0, %v989
  %v991 = vrot.slane %v986, %v990
  %v993 = vmul.f32 %v984, %v991
  %vm994 = vcmask 254976
  %v995 = vsel %vm994, %v993, 0.0
  %996 = vadd.xlane.f32.xlu0 %v995
  %v997 = vpop.xlane.xlu0 %996
  %v998 = vld [vmem:[%s8] sm:$0x1]
  %v1000 = vlaneseq
  %v1001 = vshrl.u32 %v1000, 7
  %v1002 = vsub.s32 0, %v1001
  %v1003 = vrot.slane %v998, %v1002
  %v1005 = vmul.f32 %v985, %v1003
  %vm1006 = vcmask 123904
  %v1007 = vsel %vm1006, %v1005, 0.0
  %1008 = vadd.xlane.f32.xlu0 %v1007
  %v1009 = vpop.xlane.xlu0 %1008
  %v1010 = vadd.f32 %v997, %v1009
  %v1011 = vld [vmem:[%s6] sm:$0x3]
  %v1012 = vld [vmem:[%s9] sm:$0x1]
  %v1014 = vlaneseq
  %v1015 = vshrl.u32 %v1014, 7
  %v1016 = vsub.s32 0, %v1015
  %v1017 = vrot.slane %v1012, %v1016
  %v1019 = vmul.f32 %v1011, %v1017
  %vm1020 = vcmask 25600
  %v1021 = vsel %vm1020, %v1019, 0.0
  %1022 = vadd.xlane.f32.xlu0 %v1021
  %v1023 = vpop.xlane.xlu0 %1022
  %v1024 = vadd.f32 %v1010, %v1023
  %v1025 = vld [vmem:[#allocation2] sm:$0x1]
  %v1027 = vlaneseq
  %v1028 = vshrl.u32 %v1027, 7
  %v1029 = vsub.s32 0, %v1028
  %v1030 = vrot.slane %v1025, %v1029
  %v1032 = vadd.f32 %v1024, %v1030
  %vm1033 = vcmask 1024
  %1034 = vst.msk [vmem:[%s11] sm:$0x3] %vm1033, %v1032
  // Predicated region
  $region46: #{ssl_multispec_forward.1} parent=0 // pred_check
    _
  $region47: #{ssl_multispec_forward.1} parent=0 // pred_check_branch
    %1036 = sbr.rel (0) target = $region49
  $region48: #{ssl_multispec_forward.1} parent=0 // pred_region
    _
  $region49: #{ssl_multispec_forward.1} parent=0 // pred_fallthru
    _
  // Predicated region
  $region50: #{ssl_multispec_forward.1} parent=0 // pred_check
    _
  $region51: #{ssl_multispec_forward.1} parent=0 // pred_check_branch
    %1038 = sbr.rel (0) target = $region53
  $region52: #{ssl_multispec_forward.1} parent=0 // pred_region
    _
  $region53: #{ssl_multispec_forward.1} parent=0 // pred_fallthru
    _

</llo_original>
